<compile_context>
chip_gen: v6e
topology: v6e:2x2x1
jax: 0.10.0
libtpu: 0.0.40
codegen_flags: <defaults>
</compile_context>

<pallas_src>
import functools

import jax
import jax.numpy as jnp
import numpy as np
from jax import lax
from jax.experimental import pallas as pl
from jax.experimental.pallas import tpu as pltpu

LOG2 = 0.6931471805599453
_LANE = 128


def _round_up(x, m):
    return ((x + m - 1) // m) * m


def _softplus(x):
    # numerically stable softplus (VPU max/abs + EUP exp/log)
    return jnp.maximum(x, 0.0) + jnp.log1p(jnp.exp(-jnp.abs(x)))


def _disent_kernel(z1_ref, z1p_ref, z2_ref, w1a_ref, w1b_ref, b1_ref, w2_ref,
                   b2_ref, jsd_ref, m_ref, *, batch, tiles_per_split, needs_mask):
    c = pl.program_id(0)          # parallel split axis (megacore on v7x)
    t = pl.program_id(1)          # batch-tile reduction axis
    tb = z2_ref.shape[0]          # batch tile size (static)

    @pl.when(t == 0)
    def _init():
        jsd_ref[...] = jnp.zeros_like(jsd_ref)
        m_ref[...] = jnp.zeros_like(m_ref)

    z1 = z1_ref[...]              # (TB, Dp) bf16
    z1p = z1p_ref[...]            # (TB, Dp) bf16 (permuted rows)
    z2 = z2_ref[...]              # (TB, Dp) bf16
    b1 = b1_ref[...]              # (1, Hp)  f32
    w2 = w2_ref[...]              # (1, Hp)  f32
    b2 = b2_ref[0, 0]             # f32 scalar (SMEM)

    # First layer.  Shared z2 @ W1a computed once, reused by joint & marginal.
    h2 = jnp.dot(z2, w1a_ref[...], preferred_element_type=jnp.float32)    # (TB, Hp)
    u_j = jnp.dot(z1, w1b_ref[...], preferred_element_type=jnp.float32)   # (TB, Hp)
    u_m = jnp.dot(z1p, w1b_ref[...], preferred_element_type=jnp.float32)  # (TB, Hp)

    h_j = jnp.maximum(h2 + u_j + b1, 0.0)
    h_m = jnp.maximum(h2 + u_m + b1, 0.0)

    # Second layer (output dim 1): VPU multiply + cross-lane reduce (XLU).
    s_j = jnp.sum(h_j * w2, axis=-1, keepdims=True) + b2                  # (TB, 1)
    s_m = jnp.sum(h_m * w2, axis=-1, keepdims=True) + b2                  # (TB, 1)

    joint = LOG2 - _softplus(-s_j)
    marginal = _softplus(-s_m) + s_m - LOG2
    per_row = joint - marginal                                            # (TB, 1)

    if needs_mask:
        # Only emitted when zero-padded batch rows exist (otherwise the biases
        # would leak into the JSD mean).
        g = c * tiles_per_split + t
        row = g * tb + lax.broadcasted_iota(jnp.int32, (tb, 1), 0)
        per_row = jnp.where(row < batch, per_row, 0.0)

    # Per-tile JSD partial reduced to a scalar, accumulated into a lane-dense
    # (1,128) block (only lane 0 carries the value).
    s_tile = jnp.sum(per_row)
    lane = lax.broadcasted_iota(jnp.int32, (1, jsd_ref.shape[-1]), 1)
    jsd_ref[...] += jnp.where(lane == 0, s_tile, 0.0)

    # 'ortho' accumulator: this tile's contribution to Z1^T Z2.  bf16 operands
    # go straight to the MXU with f32 accumulation; padded rows/cols are zero
    # so they contribute nothing.  No explicit z1 transpose is materialized.
    m_ref[...] += lax.dot_general(
        z1, z2, dimension_numbers=(((0,), (0,)), ((), ())),
        preferred_element_type=jnp.float32)


def _device_kind():
    try:
        return jax.devices()[0].device_kind.lower()
    except Exception:
        return ""


def disent_loss_pallas(z1, z2, z1_perm, w1a, w1b, b1, w2, b2):
    B, D = z1.shape
    H = w1a.shape[1]

    kind = _device_kind()
    is_v7 = ("v7" in kind) or ("tpu7" in kind)
    is_v5e = ("v5e" in kind) or ("v5 lite" in kind) or ("v5lite" in kind)

    num_splits = 2 if is_v7 else 1          # only v7x has 2 TensorCores
    Dp = _round_up(D, _LANE)                # lane-dense features
    Hp = _round_up(H, _LANE)                # lane-dense hidden

    # Generation-aware batch tile and VMEM budget (v7x has 64 MiB/TC).
    if is_v7:
        tb_cap = 256 if Dp >= 1536 else 512
        vmem_limit = 56 * 1024 * 1024
    else:
        tb_cap = 1024
        vmem_limit = 96 * 1024 * 1024
    TB = min(tb_cap, _round_up(B, 16))      # bf16 sublane multiple
    T = _round_up(pl.cdiv(B, TB), num_splits)
    T2 = T // num_splits                    # batch tiles per split
    Bp = T * TB
    needs_mask = Bp != B

    f32 = jnp.float32
    bf16 = jnp.bfloat16

    def pad2(x, r, cdim, dtype):
        if x.shape == (r, cdim) and x.dtype == dtype:
            return x                        # skip the HBM copy when aligned
        x = x.astype(dtype)
        if x.shape != (r, cdim):
            x = jnp.pad(x, ((0, r - x.shape[0]), (0, cdim - x.shape[1])))
        return x

    z1_p = pad2(z1, Bp, Dp, bf16)
    z1n_p = pad2(z1_perm, Bp, Dp, bf16)
    z2_p = pad2(z2, Bp, Dp, bf16)
    w1a_p = pad2(w1a, Dp, Hp, bf16)
    w1b_p = pad2(w1b, Dp, Hp, bf16)
    b1_p = pad2(b1, 1, Hp, f32)
    w2_p = pad2(w2, 1, Hp, f32)
    b2_p = b2.astype(f32).reshape(1, 1)

    kernel = functools.partial(_disent_kernel, batch=B, tiles_per_split=T2,
                               needs_mask=needs_mask)

    z_kwargs = dict(pipeline_mode=pl.Buffered(3)) if is_v5e else {}

    def z_spec():
        return pl.BlockSpec((TB, Dp), lambda c, t: (c * T2 + t, 0), **z_kwargs)

    def w_spec(shape):
        return pl.BlockSpec(shape, lambda c, t: (0, 0))

    jsd_parts, m_parts = pl.pallas_call(
        kernel,
        out_shape=(
            jax.ShapeDtypeStruct((num_splits, 1, _LANE), f32),  # per-split JSD sums
            jax.ShapeDtypeStruct((num_splits, Dp, Dp), f32),    # per-split Z1^T Z2
        ),
        grid_spec=pltpu.PrefetchScalarGridSpec(
            num_scalar_prefetch=0,
            grid=(num_splits, T2),
            in_specs=[
                z_spec(),                                          # z1
                z_spec(),                                          # z1_perm
                z_spec(),                                          # z2
                w_spec((Dp, Hp)),                                  # w1a (resident)
                w_spec((Dp, Hp)),                                  # w1b (resident)
                w_spec((1, Hp)),                                   # b1
                w_spec((1, Hp)),                                   # w2
                pl.BlockSpec(memory_space=pltpu.MemorySpace.SMEM), # b2 scalar
            ],
            out_specs=[
                pl.BlockSpec((None, 1, _LANE), lambda c, t: (c, 0, 0)),
                pl.BlockSpec((None, Dp, Dp), lambda c, t: (c, 0, 0)),
            ],
        ),
        compiler_params=pltpu.CompilerParams(
            dimension_semantics=("parallel", "arbitrary"),
            vmem_limit_bytes=vmem_limit,
        ),
    )(z1_p, z1n_p, z2_p, w1a_p, w1b_p, b1_p, w2_p, b2_p)

    # Tiny wrapper-side finalization (combines the per-split partials).
    jsd = jnp.sum(jsd_parts) / B                 # only lane 0 is non-zero
    m_total = jnp.sum(m_parts, axis=0)           # Z1^T Z2 (zero-padded)
    ortho = jnp.sum(m_total * m_total)           # ||Z1^T Z2||_F ** 2
    return -jsd + ortho


def disent_loss_ref(z1, z2, z1_perm, w1a, w1b, b1, w2, b2):
    z1 = z1.astype(jnp.float32)
    z2 = z2.astype(jnp.float32)
    z1_perm = z1_perm.astype(jnp.float32)
    w1a = w1a.astype(jnp.float32)
    w1b = w1b.astype(jnp.float32)

    def softplus(x):
        return jnp.maximum(x, 0.0) + jnp.log1p(jnp.exp(-jnp.abs(x)))

    def estimator(a, b):
        h = jnp.maximum(a @ w1a + b @ w1b + b1, 0.0)
        return jnp.sum(h * w2, axis=-1, keepdims=True) + b2[0, 0]

    s_j = estimator(z2, z1)
    s_m = estimator(z2, z1_perm)
    joint = LOG2 - softplus(-s_j)
    marginal = softplus(-s_m) + s_m - LOG2
    jsd = jnp.mean(joint - marginal)
    m = z1.T @ z2
    return -jsd + jnp.sum(m * m)


if __name__ == "__main__":
    B, D, H = 8, 32, 64

    key = jax.random.PRNGKey(0)
    k_z1, k_z2, k_perm, k_w1a, k_w1b, k_w2 = jax.random.split(key, 6)

    # z inputs and first-layer weights fed as bf16 (MXU-native), biases f32.
    z1 = jax.random.normal(k_z1, (B, D), dtype=jnp.float32).astype(jnp.bfloat16)
    z2 = jax.random.normal(k_z2, (B, D), dtype=jnp.float32).astype(jnp.bfloat16)

    # torch.randperm equivalent (glue, outside the kernel)
    perm = jax.random.permutation(k_perm, B)
    z1_perm = jnp.take(z1, perm, axis=0)

    # deterministic estimator parameters (MLP: 2D -> H -> 1)
    w1a = (0.05 * jax.random.normal(k_w1a, (D, H), jnp.float32)).astype(jnp.bfloat16)
    w1b = (0.05 * jax.random.normal(k_w1b, (D, H), jnp.float32)).astype(jnp.bfloat16)
    b1 = 0.01 * jnp.ones((1, H), dtype=jnp.float32)
    w2 = 0.05 * jax.random.normal(k_w2, (1, H), dtype=jnp.float32)
    b2 = jnp.full((1, 1), 0.03, dtype=jnp.float32)

    out = disent_loss_pallas(z1, z2, z1_perm, w1a, w1b, b1, w2, b2)
    out = jax.block_until_ready(out)

    ref = disent_loss_ref(z1, z2, z1_perm, w1a, w1b, b1, w2, b2)
    np.testing.assert_allclose(np.asarray(out), np.asarray(ref),
                               rtol=1e-3, atol=1e-3)

    print("KERNEL_OK")
</pallas_src>

<mosaic_0001>
module attributes {stable_mosaic.version = 11 : i64} {
  func.func @_disent_kernel(%arg0: i32, %arg1: i32, %arg2: memref<16x128xbf16, #tpu.memory_space<vmem>>, %arg3: memref<16x128xbf16, #tpu.memory_space<vmem>>, %arg4: memref<16x128xbf16, #tpu.memory_space<vmem>>, %arg5: memref<128x128xbf16, #tpu.memory_space<vmem>>, %arg6: memref<128x128xbf16, #tpu.memory_space<vmem>>, %arg7: memref<1x128xf32, #tpu.memory_space<vmem>>, %arg8: memref<1x128xf32, #tpu.memory_space<vmem>>, %arg9: memref<1x1xf32, #tpu.memory_space<smem>>, %arg10: memref<1x1x128xf32, #tpu.memory_space<vmem>>, %arg11: memref<1x128x128xf32, #tpu.memory_space<vmem>>) attributes {dimension_semantics = [#tpu.dimension_semantics<parallel>, #tpu.dimension_semantics<arbitrary>], iteration_bounds = array<i64: 1, 1>, scalar_prefetch = 0 : i64, scratch_operands = 0 : i64, tpu.core_type = #tpu.core_type<tc>, window_params = [{transform_indices = @transform_0, window_bounds = array<i64: 16, 128>}, {transform_indices = @transform_1, window_bounds = array<i64: 16, 128>}, {transform_indices = @transform_2, window_bounds = array<i64: 16, 128>}, {pipeline_mode = #tpu.pipeline_mode<synchronous>, transform_indices = @transform_3, window_bounds = array<i64: 128, 128>}, {pipeline_mode = #tpu.pipeline_mode<synchronous>, transform_indices = @transform_4, window_bounds = array<i64: 128, 128>}, {pipeline_mode = #tpu.pipeline_mode<synchronous>, transform_indices = @transform_5, window_bounds = array<i64: 1, 128>}, {pipeline_mode = #tpu.pipeline_mode<synchronous>, transform_indices = @transform_6, window_bounds = array<i64: 1, 128>}, {transform_indices = @transform_7, window_bounds = array<i64: 1, 1>}, {transform_indices = @transform_8, window_bounds = array<i64: 1, 1, 128>}, {transform_indices = @transform_9, window_bounds = array<i64: 1, 128, 128>}]} {
    %c0_i32 = arith.constant 0 : i32
    %0 = arith.cmpi eq, %arg1, %c0_i32 : i32
    %1 = arith.extui %0 : i1 to i32
    %c0_i32_0 = arith.constant 0 : i32
    %2 = arith.cmpi ne, %1, %c0_i32_0 : i32
    scf.if %2 {
      %cst_49 = arith.constant 0.000000e+00 : f32
      %96 = vector.broadcast %cst_49 : f32 to vector<1x128xf32>
      %c0_50 = arith.constant 0 : index
      %c0_51 = arith.constant 0 : index
      %c0_52 = arith.constant 0 : index
      %97 = vector.load %arg10[%c0_50, %c0_51, %c0_52] : memref<1x1x128xf32, #tpu.memory_space<vmem>>, vector<1x1x128xf32>
      %98 = vector.shape_cast %97 : vector<1x1x128xf32> to vector<1x128xf32>
      %99 = vector.shape_cast %96 : vector<1x128xf32> to vector<1x1x128xf32>
      tpu.vector_store %arg10[%c0_50, %c0_51, %c0_52], %99 {strides = array<i32>} : memref<1x1x128xf32, #tpu.memory_space<vmem>>, vector<1x1x128xf32>,
      %cst_53 = arith.constant 0.000000e+00 : f32
      %100 = vector.broadcast %cst_53 : f32 to vector<128x128xf32>
      %c0_54 = arith.constant 0 : index
      %c0_55 = arith.constant 0 : index
      %c0_56 = arith.constant 0 : index
      %101 = vector.load %arg11[%c0_54, %c0_55, %c0_56] : memref<1x128x128xf32, #tpu.memory_space<vmem>>, vector<1x128x128xf32>
      %102 = vector.shape_cast %101 : vector<1x128x128xf32> to vector<128x128xf32>
      %103 = vector.shape_cast %100 : vector<128x128xf32> to vector<1x128x128xf32>
      tpu.vector_store %arg11[%c0_54, %c0_55, %c0_56], %103 {strides = array<i32>} : memref<1x128x128xf32, #tpu.memory_space<vmem>>, vector<1x128x128xf32>,
    } else {
    }
    %c0 = arith.constant 0 : index
    %c0_1 = arith.constant 0 : index
    %3 = vector.load %arg2[%c0, %c0_1] : memref<16x128xbf16, #tpu.memory_space<vmem>>, vector<16x128xbf16>
    %c0_2 = arith.constant 0 : index
    %c0_3 = arith.constant 0 : index
    %4 = vector.load %arg3[%c0_2, %c0_3] : memref<16x128xbf16, #tpu.memory_space<vmem>>, vector<16x128xbf16>
    %c0_4 = arith.constant 0 : index
    %c0_5 = arith.constant 0 : index
    %5 = vector.load %arg4[%c0_4, %c0_5] : memref<16x128xbf16, #tpu.memory_space<vmem>>, vector<16x128xbf16>
    %c0_6 = arith.constant 0 : index
    %c0_7 = arith.constant 0 : index
    %6 = vector.load %arg7[%c0_6, %c0_7] : memref<1x128xf32, #tpu.memory_space<vmem>>, vector<1x128xf32>
    %c0_8 = arith.constant 0 : index
    %c0_9 = arith.constant 0 : index
    %7 = vector.load %arg8[%c0_8, %c0_9] : memref<1x128xf32, #tpu.memory_space<vmem>>, vector<1x128xf32>
    %c0_10 = arith.constant 0 : index
    %c0_11 = arith.constant 0 : index
    %8 = memref.load %arg9[%c0_10, %c0_11] : memref<1x1xf32, #tpu.memory_space<smem>>
    %c0_12 = arith.constant 0 : index
    %c0_13 = arith.constant 0 : index
    %9 = vector.load %arg5[%c0_12, %c0_13] : memref<128x128xbf16, #tpu.memory_space<vmem>>, vector<128x128xbf16>
    %cst = arith.constant dense<0.000000e+00> : vector<16x128xf32>
    %10 = tpu.matmul %5, %9, %cst {dimension_numbers = #tpu.dot_dimension_numbers<[1], [0], [0], [1], [0, 0, 1, 1], [], []>} : vector<16x128xbf16>, vector<128x128xbf16>, vector<16x128xf32> -> vector<16x128xf32>
    %c0_14 = arith.constant 0 : index
    %c0_15 = arith.constant 0 : index
    %11 = vector.load %arg6[%c0_14, %c0_15] : memref<128x128xbf16, #tpu.memory_space<vmem>>, vector<128x128xbf16>
    %cst_16 = arith.constant dense<0.000000e+00> : vector<16x128xf32>
    %12 = tpu.matmul %3, %11, %cst_16 {dimension_numbers = #tpu.dot_dimension_numbers<[1], [0], [0], [1], [0, 0, 1, 1], [], []>} : vector<16x128xbf16>, vector<128x128xbf16>, vector<16x128xf32> -> vector<16x128xf32>
    %c0_17 = arith.constant 0 : index
    %c0_18 = arith.constant 0 : index
    %13 = vector.load %arg6[%c0_17, %c0_18] : memref<128x128xbf16, #tpu.memory_space<vmem>>, vector<128x128xbf16>
    %cst_19 = arith.constant dense<0.000000e+00> : vector<16x128xf32>
    %14 = tpu.matmul %4, %13, %cst_19 {dimension_numbers = #tpu.dot_dimension_numbers<[1], [0], [0], [1], [0, 0, 1, 1], [], []>} : vector<16x128xbf16>, vector<128x128xbf16>, vector<16x128xf32> -> vector<16x128xf32>
    %15 = arith.addf %10, %12 : vector<16x128xf32>
    %16 = vector.broadcast %6 : vector<1x128xf32> to vector<16x128xf32>
    %17 = arith.addf %15, %16 : vector<16x128xf32>
    %cst_20 = arith.constant 0.000000e+00 : f32
    %18 = vector.broadcast %cst_20 : f32 to vector<16x128xf32>
    %19 = arith.maximumf %17, %18 : vector<16x128xf32>
    %20 = arith.addf %10, %14 : vector<16x128xf32>
    %21 = vector.broadcast %6 : vector<1x128xf32> to vector<16x128xf32>
    %22 = arith.addf %20, %21 : vector<16x128xf32>
    %cst_21 = arith.constant 0.000000e+00 : f32
    %23 = vector.broadcast %cst_21 : f32 to vector<16x128xf32>
    %24 = arith.maximumf %22, %23 : vector<16x128xf32>
    %25 = vector.broadcast %7 : vector<1x128xf32> to vector<16x128xf32>
    %26 = arith.mulf %19, %25 : vector<16x128xf32>
    %cst_22 = arith.constant dense<0.000000e+00> : vector<16xf32>
    %27 = vector.multi_reduction <add>, %26, %cst_22 [1] : vector<16x128xf32> to vector<16xf32>
    %28 = vector.shape_cast %27 : vector<16xf32> to vector<16x1xf32>
    %29 = vector.broadcast %8 : f32 to vector<16x1xf32>
    %30 = arith.addf %28, %29 : vector<16x1xf32>
    %31 = vector.broadcast %7 : vector<1x128xf32> to vector<16x128xf32>
    %32 = arith.mulf %24, %31 : vector<16x128xf32>
    %cst_23 = arith.constant dense<0.000000e+00> : vector<16xf32>
    %33 = vector.multi_reduction <add>, %32, %cst_23 [1] : vector<16x128xf32> to vector<16xf32>
    %34 = vector.shape_cast %33 : vector<16xf32> to vector<16x1xf32>
    %35 = vector.broadcast %8 : f32 to vector<16x1xf32>
    %36 = arith.addf %34, %35 : vector<16x1xf32>
    %cst_24 = arith.constant 0.000000e+00 : f32
    %37 = vector.broadcast %cst_24 : f32 to vector<16x1xf32>
    %38 = arith.subf %37, %30 : vector<16x1xf32>
    %cst_25 = arith.constant 0.000000e+00 : f32
    %39 = vector.broadcast %cst_25 : f32 to vector<16x1xf32>
    %40 = arith.maximumf %38, %39 : vector<16x1xf32>
    %41 = math.absf %38 : vector<16x1xf32>
    %cst_26 = arith.constant 0.000000e+00 : f32
    %42 = vector.broadcast %cst_26 : f32 to vector<16x1xf32>
    %43 = arith.subf %42, %41 : vector<16x1xf32>
    %44 = math.exp %43 : vector<16x1xf32>
    %45 = math.log1p %44 : vector<16x1xf32>
    %46 = arith.addf %40, %45 : vector<16x1xf32>
    %cst_27 = arith.constant 0.693147182 : f32
    %47 = vector.broadcast %cst_27 : f32 to vector<16x1xf32>
    %48 = arith.subf %47, %46 : vector<16x1xf32>
    %cst_28 = arith.constant 0.000000e+00 : f32
    %49 = vector.broadcast %cst_28 : f32 to vector<16x1xf32>
    %50 = arith.subf %49, %36 : vector<16x1xf32>
    %cst_29 = arith.constant 0.000000e+00 : f32
    %51 = vector.broadcast %cst_29 : f32 to vector<16x1xf32>
    %52 = arith.maximumf %50, %51 : vector<16x1xf32>
    %53 = math.absf %50 : vector<16x1xf32>
    %cst_30 = arith.constant 0.000000e+00 : f32
    %54 = vector.broadcast %cst_30 : f32 to vector<16x1xf32>
    %55 = arith.subf %54, %53 : vector<16x1xf32>
    %56 = math.exp %55 : vector<16x1xf32>
    %57 = math.log1p %56 : vector<16x1xf32>
    %58 = arith.addf %52, %57 : vector<16x1xf32>
    %59 = arith.addf %58, %36 : vector<16x1xf32>
    %cst_31 = arith.constant 0.693147182 : f32
    %60 = vector.broadcast %cst_31 : f32 to vector<16x1xf32>
    %61 = arith.subf %59, %60 : vector<16x1xf32>
    %62 = arith.subf %48, %61 : vector<16x1xf32>
    %c1_i32 = arith.constant 1 : i32
    %63 = arith.muli %arg0, %c1_i32 : i32
    %64 = arith.addi %63, %arg1 : i32
    %c16_i32 = arith.constant 16 : i32
    %65 = arith.muli %64, %c16_i32 : i32
    %66 = tpu.iota {dimensions = array<i32: 0>} : vector<16x1xi32>
    %67 = vector.broadcast %65 : i32 to vector<16x1xi32>
    %68 = arith.addi %67, %66 : vector<16x1xi32>
    %c8_i32 = arith.constant 8 : i32
    %69 = vector.broadcast %c8_i32 : i32 to vector<16x1xi32>
    %70 = arith.cmpi slt, %68, %69 : vector<16x1xi32>
    %cst_32 = arith.constant 0.000000e+00 : f32
    %71 = vector.broadcast %cst_32 : f32 to vector<16x1xf32>
    %72 = arith.select %70, %62, %71 : vector<16x1xi1>, vector<16x1xf32>
    %73 = vector.shape_cast %72 : vector<16x1xf32> to vector<1x16x1xf32>
    %cst_33 = arith.constant dense<0.000000e+00> : vector<1xf32>
    %74 = vector.multi_reduction <add>, %73, %cst_33 [1, 2] : vector<1x16x1xf32> to vector<1xf32>
    %75 = vector.shape_cast %74 : vector<1xf32> to vector<1x1x1xf32>
    %76 = vector.extract %75[0, 0, 0] : f32 from vector<1x1x1xf32>
    %77 = tpu.iota {dimensions = array<i32: 1>} : vector<1x128xi32>
    %c0_34 = arith.constant 0 : index
    %c0_35 = arith.constant 0 : index
    %c0_36 = arith.constant 0 : index
    %78 = vector.load %arg10[%c0_34, %c0_35, %c0_36] : memref<1x1x128xf32, #tpu.memory_space<vmem>>, vector<1x1x128xf32>
    %79 = vector.shape_cast %78 : vector<1x1x128xf32> to vector<1x128xf32>
    %c0_i32_37 = arith.constant 0 : i32
    %80 = vector.broadcast %c0_i32_37 : i32 to vector<1x128xi32>
    %81 = arith.cmpi eq, %77, %80 : vector<1x128xi32>
    %cst_38 = arith.constant 0.000000e+00 : f32
    %82 = vector.broadcast %76 : f32 to vector<1x128xf32>
    %83 = vector.broadcast %cst_38 : f32 to vector<1x128xf32>
    %84 = arith.select %81, %82, %83 : vector<1x128xi1>, vector<1x128xf32>
    %85 = arith.addf %79, %84 : vector<1x128xf32>
    %c0_39 = arith.constant 0 : index
    %c0_40 = arith.constant 0 : index
    %c0_41 = arith.constant 0 : index
    %86 = vector.load %arg10[%c0_39, %c0_40, %c0_41] : memref<1x1x128xf32, #tpu.memory_space<vmem>>, vector<1x1x128xf32>
    %87 = vector.shape_cast %86 : vector<1x1x128xf32> to vector<1x128xf32>
    %88 = vector.shape_cast %85 : vector<1x128xf32> to vector<1x1x128xf32>
    tpu.vector_store %arg10[%c0_39, %c0_40, %c0_41], %88 {strides = array<i32>} : memref<1x1x128xf32, #tpu.memory_space<vmem>>, vector<1x1x128xf32>,
    %c0_42 = arith.constant 0 : index
    %c0_43 = arith.constant 0 : index
    %c0_44 = arith.constant 0 : index
    %89 = vector.load %arg11[%c0_42, %c0_43, %c0_44] : memref<1x128x128xf32, #tpu.memory_space<vmem>>, vector<1x128x128xf32>
    %90 = vector.shape_cast %89 : vector<1x128x128xf32> to vector<128x128xf32>
    %cst_45 = arith.constant dense<0.000000e+00> : vector<128x128xf32>
    %91 = tpu.matmul %3, %5, %cst_45 {dimension_numbers = #tpu.dot_dimension_numbers<[0], [0], [1], [1], [0, 1, 1, 1], [], []>} : vector<16x128xbf16>, vector<16x128xbf16>, vector<128x128xf32> -> vector<128x128xf32>
    %92 = arith.addf %90, %91 : vector<128x128xf32>
    %c0_46 = arith.constant 0 : index
    %c0_47 = arith.constant 0 : index
    %c0_48 = arith.constant 0 : index
    %93 = vector.load %arg11[%c0_46, %c0_47, %c0_48] : memref<1x128x128xf32, #tpu.memory_space<vmem>>, vector<1x128x128xf32>
    %94 = vector.shape_cast %93 : vector<1x128x128xf32> to vector<128x128xf32>
    %95 = vector.shape_cast %92 : vector<128x128xf32> to vector<1x128x128xf32>
    tpu.vector_store %arg11[%c0_46, %c0_47, %c0_48], %95 {strides = array<i32>} : memref<1x128x128xf32, #tpu.memory_space<vmem>>, vector<1x128x128xf32>,
    return
  }
  func.func @transform_0(%arg0: i32, %arg1: i32) -> (i32, i32) {
    %c1_i32 = arith.constant 1 : i32
    %0 = arith.muli %arg0, %c1_i32 : i32
    %1 = arith.addi %0, %arg1 : i32
    %c0_i32 = arith.constant 0 : i32
    %c0_i32_0 = arith.constant 0 : i32
    return %1, %c0_i32 : i32, i32
  }
  func.func @transform_1(%arg0: i32, %arg1: i32) -> (i32, i32) {
    %c1_i32 = arith.constant 1 : i32
    %0 = arith.muli %arg0, %c1_i32 : i32
    %1 = arith.addi %0, %arg1 : i32
    %c0_i32 = arith.constant 0 : i32
    %c0_i32_0 = arith.constant 0 : i32
    return %1, %c0_i32 : i32, i32
  }
  func.func @transform_2(%arg0: i32, %arg1: i32) -> (i32, i32) {
    %c1_i32 = arith.constant 1 : i32
    %0 = arith.muli %arg0, %c1_i32 : i32
    %1 = arith.addi %0, %arg1 : i32
    %c0_i32 = arith.constant 0 : i32
    %c0_i32_0 = arith.constant 0 : i32
    return %1, %c0_i32 : i32, i32
  }
  func.func @transform_3(%arg0: i32, %arg1: i32) -> (i32, i32) {
    %c0_i32 = arith.constant 0 : i32
    %c0_i32_0 = arith.constant 0 : i32
    %c0_i32_1 = arith.constant 0 : i32
    return %c0_i32, %c0_i32_0 : i32, i32
  }
  func.func @transform_4(%arg0: i32, %arg1: i32) -> (i32, i32) {
    %c0_i32 = arith.constant 0 : i32
    %c0_i32_0 = arith.constant 0 : i32
    %c0_i32_1 = arith.constant 0 : i32
    return %c0_i32, %c0_i32_0 : i32, i32
  }
  func.func @transform_5(%arg0: i32, %arg1: i32) -> (i32, i32) {
    %c0_i32 = arith.constant 0 : i32
    %c0_i32_0 = arith.constant 0 : i32
    %c0_i32_1 = arith.constant 0 : i32
    return %c0_i32, %c0_i32_0 : i32, i32
  }
  func.func @transform_6(%arg0: i32, %arg1: i32) -> (i32, i32) {
    %c0_i32 = arith.constant 0 : i32
    %c0_i32_0 = arith.constant 0 : i32
    %c0_i32_1 = arith.constant 0 : i32
    return %c0_i32, %c0_i32_0 : i32, i32
  }
  func.func @transform_7(%arg0: i32, %arg1: i32) -> (i32, i32) {
    %c0_i32 = arith.constant 0 : i32
    %c0_i32_0 = arith.constant 0 : i32
    %c0_i32_1 = arith.constant 0 : i32
    return %c0_i32, %c0_i32_0 : i32, i32
  }
  func.func @transform_8(%arg0: i32, %arg1: i32) -> (i32, i32, i32) {
    %c0_i32 = arith.constant 0 : i32
    %c0_i32_0 = arith.constant 0 : i32
    %c0_i32_1 = arith.constant 0 : i32
    return %arg0, %c0_i32, %c0_i32_0 : i32, i32, i32
  }
  func.func @transform_9(%arg0: i32, %arg1: i32) -> (i32, i32, i32) {
    %c0_i32 = arith.constant 0 : i32
    %c0_i32_0 = arith.constant 0 : i32
    %c0_i32_1 = arith.constant 0 : i32
    return %arg0, %c0_i32, %c0_i32_0 : i32, i32, i32
  }
}

</mosaic_0001>

<llo_original>
// kernel: tpu_custom_call.1
$region0: #{tpu_custom_call.1}
  #allocation0 [shape = 'u32[]', space=smem, size = 0x4, offset = 0x4, fixed_abs, tag = 'smem constant byte address 0x4 - core index']
  #allocation1 [shape = 'u32[144,128]{1,0:T(1,128)}', space=vmem, size = 0x12000, scoped, tag = 'internal scratch']
  #allocation2 [shape = 'f32[1,1]{1,0:T(1,128)S(6)}', space=smem, size = 0x200, scoped, tag = 'scoped memory for tpu_custom_call.1']
  %s0 = inlined_call_operand.hbm [shape: bf16[16,128], index: 0, kind: input, shape index: {}]
  %s1 = inlined_call_operand.hbm [shape: bf16[16,128], index: 1, kind: input, shape index: {}]
  %s2 = inlined_call_operand.hbm [shape: bf16[16,128], index: 2, kind: input, shape index: {}]
  %s3 = inlined_call_operand.hbm [shape: bf16[128,128], index: 3, kind: input, shape index: {}]
  %s4 = inlined_call_operand.hbm [shape: bf16[128,128], index: 4, kind: input, shape index: {}]
  %s5 = inlined_call_operand.vmem [shape: f32[1,128], index: 5, kind: input, shape index: {}]
  %s6 = inlined_call_operand.vmem [shape: f32[1,128], index: 6, kind: input, shape index: {}]
  %s7 = inlined_call_operand.<no memory space> [shape: f32[1,1], index: 7, kind: input, shape index: {}]
  %s8 = inlined_call_operand.hbm [shape: f32[1,1,128], index: 8, kind: output, shape index: {0}]
  %s9 = inlined_call_operand.hbm [shape: f32[1,128,128], index: 9, kind: output, shape index: {1}]
  %10 = xla_tuple %s8, %s9
  %s11 = sld [smem:[#allocation0]]
  $region74: #{tpu_custom_call.1} parent=0
    _
  %s13 = ssub.s32 1, %s11
  %s14 = scalar_select 0, %s13, %s11
  %15 = sst [smem:[#allocation2]] %s7
  $region1: #{tpu_custom_call.1} parent=0
    #allocation3 [shape = 'u8[4096]{0}', space=vmem, size = 0x1000, scoped, tag = 'input window, operand 0, single buffered']
    #allocation4 [shape = 's32[1]{0}', space=sflag, size = 0x4, scoped, tag = 'scoped memory for tpu_custom_call.1']
    #allocation5 [shape = 's32[1]{0}', space=sflag, size = 0x4, scoped, tag = 'scoped memory for tpu_custom_call.1']
    #allocation6 [shape = 'u8[4096]{0}', space=vmem, size = 0x1000, scoped, tag = 'input window, operand 1, single buffered']
    #allocation7 [shape = 's32[1]{0}', space=sflag, size = 0x4, scoped, tag = 'scoped memory for tpu_custom_call.1']
    #allocation8 [shape = 'u8[4096]{0}', space=vmem, size = 0x1000, scoped, tag = 'input window, operand 2, single buffered']
    #allocation9 [shape = 'u8[32768]{0}', space=vmem, size = 0x8000, scoped, tag = 'input window, operand 3, single buffered']
    #allocation10 [shape = 's32[1]{0}', space=sflag, size = 0x4, scoped, tag = 'scoped memory for tpu_custom_call.1']
    #allocation11 [shape = 'u8[32768]{0}', space=vmem, size = 0x8000, scoped, tag = 'input window, operand 4, single buffered']
    #allocation12 [shape = 'u8[512]{0}', space=vmem, size = 0x400, scoped, tag = 'output window, operand 0, single buffered']
    #allocation13 [shape = 'u8[65536]{0}', space=vmem, size = 0x10000, scoped, tag = 'output window, operand 1, single buffered']
    #allocation14 [shape = 's32[1]{0}', space=sflag, size = 0x4, scoped, tag = 'scoped memory for tpu_custom_call.1']
    %16 = vsyncpa [#allocation4], 0
    %17 = vsyncpa [#allocation7], 0
    %18 = vsyncpa [#allocation10], 0
    %19 = vsyncpa [#allocation5], 0
    %20 = vsyncpa [#allocation14], 0
    // Predicated region
    $region2: #{tpu_custom_call.1} parent=1 // pred_check
      _
    $region3: #{tpu_custom_call.1} parent=1 // pred_check_branch
      %22 = sbr.rel (0) target = $region5
    $region4: #{tpu_custom_call.1} parent=1 // pred_region
      %s23 = sadd.s32 0, 0
      %s24 = smul.u32 2, %s23
      %s26 = ssub.s32 128, 128
      %27 = vsyncadd [#allocation4], %s26
      %s28 = smul.addr %s24, 64
      %s29 = scalar_lea.hbm %s0, %s28
      %s30 = sshll.u32 [#allocation3], 4
      %s31 = int_to_ptr.vmem [resolvable:$true] %s30
      %36 = dma.hbm_to_vmem [thread:$0]  %s29, 128, %s31, [#allocation4], 64, 64, 4
    $region5: #{tpu_custom_call.1} parent=1 // pred_fallthru
      _
    // Predicated region
    $region6: #{tpu_custom_call.1} parent=1 // pred_check
      _
    $region7: #{tpu_custom_call.1} parent=1 // pred_check_branch
      %38 = sbr.rel (0) target = $region9
    $region8: #{tpu_custom_call.1} parent=1 // pred_region
      %s39 = sadd.s32 0, 0
      %s40 = smul.u32 2, %s39
      %s42 = ssub.s32 128, 128
      %43 = vsyncadd [#allocation7], %s42
      %s44 = smul.addr %s40, 64
      %s45 = scalar_lea.hbm %s1, %s44
      %s46 = sshll.u32 [#allocation6], 4
      %s47 = int_to_ptr.vmem [resolvable:$true] %s46
      %52 = dma.hbm_to_vmem [thread:$0]  %s45, 128, %s47, [#allocation7], 64, 64, 4
    $region9: #{tpu_custom_call.1} parent=1 // pred_fallthru
      _
    // Predicated region
    $region10: #{tpu_custom_call.1} parent=1 // pred_check
      _
    $region11: #{tpu_custom_call.1} parent=1 // pred_check_branch
      %54 = sbr.rel (0) target = $region13
    $region12: #{tpu_custom_call.1} parent=1 // pred_region
      %s55 = sadd.s32 0, 0
      %s56 = smul.u32 2, %s55
      %s58 = ssub.s32 128, 128
      %59 = vsyncadd [#allocation7], %s58
      %s60 = smul.addr %s56, 64
      %s61 = scalar_lea.hbm %s2, %s60
      %s62 = sshll.u32 [#allocation8], 4
      %s63 = int_to_ptr.vmem [resolvable:$true] %s62
      %68 = dma.hbm_to_vmem [thread:$0]  %s61, 128, %s63, [#allocation7], 64, 64, 4
    $region13: #{tpu_custom_call.1} parent=1 // pred_fallthru
      _
    // Predicated region
    $region14: #{tpu_custom_call.1} parent=1 // pred_check
      _
    $region15: #{tpu_custom_call.1} parent=1 // pred_check_branch
      %70 = sbr.rel (0) target = $region17
    $region16: #{tpu_custom_call.1} parent=1 // pred_region
      %s72 = ssub.s32 1024, 1024
      %73 = vsyncadd [#allocation10], %s72
      %s74 = sshll.u32 [#allocation9], 4
      %s75 = int_to_ptr.vmem [resolvable:$true] %s74
      %80 = dma.hbm_to_vmem [thread:$0]  %s3, 1024, %s75, [#allocation10], 64, 64, 4
    $region17: #{tpu_custom_call.1} parent=1 // pred_fallthru
      _
    // Predicated region
    $region18: #{tpu_custom_call.1} parent=1 // pred_check
      _
    $region19: #{tpu_custom_call.1} parent=1 // pred_check_branch
      %82 = sbr.rel (0) target = $region21
    $region20: #{tpu_custom_call.1} parent=1 // pred_region
      %s84 = ssub.s32 1024, 1024
      %85 = vsyncadd [#allocation10], %s84
      %s86 = sshll.u32 [#allocation11], 4
      %s87 = int_to_ptr.vmem [resolvable:$true] %s86
      %92 = dma.hbm_to_vmem [thread:$0]  %s4, 1024, %s87, [#allocation10], 64, 64, 4
    $region21: #{tpu_custom_call.1} parent=1 // pred_fallthru
      _
    // Predicated region
    $region22: #{tpu_custom_call.1} parent=1 // pred_check
      _
    $region23: #{tpu_custom_call.1} parent=1 // pred_check_branch
      %94 = sbr.rel (0) target = $region25
    $region24: #{tpu_custom_call.1} parent=1 // pred_region
      _
    $region25: #{tpu_custom_call.1} parent=1 // pred_fallthru
      _
    // Predicated region
    $region26: #{tpu_custom_call.1} parent=1 // pred_check
      _
    $region27: #{tpu_custom_call.1} parent=1 // pred_check_branch
      %96 = sbr.rel (0) target = $region29
    $region28: #{tpu_custom_call.1} parent=1 // pred_region
      _
    $region29: #{tpu_custom_call.1} parent=1 // pred_fallthru
      _
    // Predicated region
    $region30: #{tpu_custom_call.1} parent=1 // pred_check
      _
    $region31: #{tpu_custom_call.1} parent=1 // pred_check_branch
      %98 = sbr.rel (0) target = $region33
    $region32: #{tpu_custom_call.1} parent=1 // pred_region
      _
    $region33: #{tpu_custom_call.1} parent=1 // pred_fallthru
      _
    // Predicated region
    $region34: #{tpu_custom_call.1} parent=1 // pred_check
      _
    $region35: #{tpu_custom_call.1} parent=1 // pred_check_branch
      %100 = sbr.rel (0) target = $region37
    $region36: #{tpu_custom_call.1} parent=1 // pred_region
      %101 = dma.done [#allocation4], 128
    $region37: #{tpu_custom_call.1} parent=1 // pred_fallthru
      _
    // Predicated region
    $region38: #{tpu_custom_call.1} parent=1 // pred_check
      _
    $region39: #{tpu_custom_call.1} parent=1 // pred_check_branch
      %103 = sbr.rel (0) target = $region41
    $region40: #{tpu_custom_call.1} parent=1 // pred_region
      %104 = dma.done [#allocation7], 128
    $region41: #{tpu_custom_call.1} parent=1 // pred_fallthru
      _
    // Predicated region
    $region42: #{tpu_custom_call.1} parent=1 // pred_check
      _
    $region43: #{tpu_custom_call.1} parent=1 // pred_check_branch
      %106 = sbr.rel (0) target = $region45
    $region44: #{tpu_custom_call.1} parent=1 // pred_region
      %107 = dma.done [#allocation7], 128
    $region45: #{tpu_custom_call.1} parent=1 // pred_fallthru
      _
    // Predicated region
    $region46: #{tpu_custom_call.1} parent=1 // pred_check
      _
    $region47: #{tpu_custom_call.1} parent=1 // pred_check_branch
      %109 = sbr.rel (0) target = $region49
    $region48: #{tpu_custom_call.1} parent=1 // pred_region
      %110 = dma.done [#allocation10], 1024
    $region49: #{tpu_custom_call.1} parent=1 // pred_fallthru
      _
    // Predicated region
    $region50: #{tpu_custom_call.1} parent=1 // pred_check
      _
    $region51: #{tpu_custom_call.1} parent=1 // pred_check_branch
      %112 = sbr.rel (0) target = $region53
    $region52: #{tpu_custom_call.1} parent=1 // pred_region
      %113 = dma.done [#allocation10], 1024
    $region53: #{tpu_custom_call.1} parent=1 // pred_fallthru
      _
    %s114 = sadd.s32 0, 0
    %s115 = smul.u32 2, %s114
    %s116 = sadd.s32 0, 0
    %s117 = smul.u32 2, %s116
    %s118 = sadd.s32 0, 0
    %s119 = smul.u32 2, %s118
    %p121 = scmp.eq.s32.totalorder 0, 0
    // Predicated region
    $region54: #{tpu_custom_call.1} parent=1 // pred_check
      %p122 = pneg %p121
    $region55: #{tpu_custom_call.1} parent=1 // pred_check_branch
      %124 = sbr.rel (%p122) target = $region57
    $region56: #{tpu_custom_call.1} parent=1 // pred_region
      %125 = vst [vmem:[#allocation12] sm:$0x1] 0.0
      %126 = vst [vmem:[#allocation13] sm:$0xff] 0.0
      %127 = vst [vmem:[#allocation13 + $0x8] sm:$0xff] 0.0
      %128 = vst [vmem:[#allocation13 + $0x10] sm:$0xff] 0.0
      %129 = vst [vmem:[#allocation13 + $0x18] sm:$0xff] 0.0
      %130 = vst [vmem:[#allocation13 + $0x20] sm:$0xff] 0.0
      %131 = vst [vmem:[#allocation13 + $0x28] sm:$0xff] 0.0
      %132 = vst [vmem:[#allocation13 + $0x30] sm:$0xff] 0.0
      %133 = vst [vmem:[#allocation13 + $0x38] sm:$0xff] 0.0
      %134 = vst [vmem:[#allocation13 + $0x40] sm:$0xff] 0.0
      %135 = vst [vmem:[#allocation13 + $0x48] sm:$0xff] 0.0
      %136 = vst [vmem:[#allocation13 + $0x50] sm:$0xff] 0.0
      %137 = vst [vmem:[#allocation13 + $0x58] sm:$0xff] 0.0
      %138 = vst [vmem:[#allocation13 + $0x60] sm:$0xff] 0.0
      %139 = vst [vmem:[#allocation13 + $0x68] sm:$0xff] 0.0
      %140 = vst [vmem:[#allocation13 + $0x70] sm:$0xff] 0.0
      %141 = vst [vmem:[#allocation13 + $0x78] sm:$0xff] 0.0
    $region57: #{tpu_custom_call.1} parent=1 // pred_fallthru
      _
    %v142 = vld [vmem:[#allocation3] sm:$0xf]
    %v143 = vld [vmem:[#allocation3 + $0x4] sm:$0xf]
    %v144 = vld [vmem:[#allocation6] sm:$0xf]
    %v145 = vld [vmem:[#allocation6 + $0x4] sm:$0xf]
    %v146 = vld [vmem:[#allocation8] sm:$0xf]
    %v147 = vld [vmem:[#allocation8 + $0x4] sm:$0xf]
    %v148 = vld [vmem:[%s5] sm:$0x1]
    %v149 = vld [vmem:[%s6] sm:$0x1]
    %s150 = sld [smem:[#allocation2]]
    %v151 = vld [vmem:[#allocation9] sm:$0xf]
    %v152 = vld [vmem:[#allocation9 + $0x4] sm:$0xf]
    %v153 = vld [vmem:[#allocation9 + $0x8] sm:$0xf]
    %v154 = vld [vmem:[#allocation9 + $0xc] sm:$0xf]
    %v155 = vld [vmem:[#allocation9 + $0x10] sm:$0xf]
    %v156 = vld [vmem:[#allocation9 + $0x14] sm:$0xf]
    %v157 = vld [vmem:[#allocation9 + $0x18] sm:$0xf]
    %v158 = vld [vmem:[#allocation9 + $0x1c] sm:$0xf]
    %v159 = vld [vmem:[#allocation9 + $0x20] sm:$0xf]
    %v160 = vld [vmem:[#allocation9 + $0x24] sm:$0xf]
    %v161 = vld [vmem:[#allocation9 + $0x28] sm:$0xf]
    %v162 = vld [vmem:[#allocation9 + $0x2c] sm:$0xf]
    %v163 = vld [vmem:[#allocation9 + $0x30] sm:$0xf]
    %v164 = vld [vmem:[#allocation9 + $0x34] sm:$0xf]
    %v165 = vld [vmem:[#allocation9 + $0x38] sm:$0xf]
    %v166 = vld [vmem:[#allocation9 + $0x3c] sm:$0xf]
    %v169 = vunpack.c.l.b16 %v146
    %v170 = vunpack.c.l.b16 %v147
    %v171 = vpack.c.b16 %v170, %v169
    %v189 = vunpack.c.l.b16 %v151
    %v190 = vunpack.c.l.b16 %v152
    %v191 = vunpack.c.l.b16 %v153
    %v192 = vunpack.c.l.b16 %v154
    %v193 = vunpack.c.l.b16 %v155
    %v194 = vunpack.c.l.b16 %v156
    %v195 = vunpack.c.l.b16 %v157
    %v196 = vunpack.c.l.b16 %v158
    %v197 = vunpack.c.l.b16 %v159
    %v198 = vunpack.c.l.b16 %v160
    %v199 = vunpack.c.l.b16 %v161
    %v200 = vunpack.c.l.b16 %v162
    %v201 = vunpack.c.l.b16 %v163
    %v202 = vunpack.c.l.b16 %v164
    %v203 = vunpack.c.l.b16 %v165
    %v204 = vunpack.c.l.b16 %v166
    %v205 = vpack.c.b16 %v190, %v189
    %v206 = vpack.c.b16 %v192, %v191
    %v207 = vpack.c.b16 %v194, %v193
    %v208 = vpack.c.b16 %v196, %v195
    %v209 = vpack.c.b16 %v198, %v197
    %v210 = vpack.c.b16 %v200, %v199
    %v211 = vpack.c.b16 %v202, %v201
    %v212 = vpack.c.b16 %v204, %v203
    %221 = vmatprep.subr.bf16.mxu0 0
    %222 = vmatpush1.bf16.msra.mxu0 %v212
    %223 = vmatprep.subr.bf16.mxu0 0
    %224 = vmatpush1.bf16.msra.mxu0 %v211
    %225 = vmatprep.subr.bf16.mxu0 0
    %226 = vmatpush1.bf16.msra.mxu0 %v210
    %227 = vmatprep.subr.bf16.mxu0 0
    %228 = vmatpush1.bf16.msra.mxu0 %v209
    %229 = vmatprep.subr.bf16.mxu0 0
    %230 = vmatpush1.bf16.msra.mxu0 %v208
    %231 = vmatprep.subr.bf16.mxu0 0
    %232 = vmatpush1.bf16.msra.mxu0 %v207
    %233 = vmatprep.subr.bf16.mxu0 0
    %234 = vmatpush1.bf16.msra.mxu0 %v206
    %235 = vmatprep.subr.bf16.mxu0 0
    %236 = vmatpush1.bf16.msra.mxu0 %v205
    %237 = vmatprep.subr.bf16.mxu0 0
    %238 = vmatpush2.bf16.msra.mxu0 0
    %239 = vmatprep.subr.bf16.mxu0 0
    %240 = vmatpush2.bf16.msra.mxu0 0
    %241 = vmatprep.subr.bf16.mxu0 0
    %242 = vmatpush2.bf16.msra.mxu0 0
    %243 = vmatprep.subr.bf16.mxu0 0
    %244 = vmatpush2.bf16.msra.mxu0 0
    %245 = vmatprep.subr.bf16.mxu0 0
    %246 = vmatpush2.bf16.msra.mxu0 0
    %247 = vmatprep.subr.bf16.mxu0 0
    %248 = vmatpush2.bf16.msra.mxu0 0
    %249 = vmatprep.subr.bf16.mxu0 0
    %250 = vmatpush2.bf16.msra.mxu0 0
    %251 = vmatprep.subr.bf16.mxu0 0
    %252 = vmatpush2.bf16.msra.mxu0 0
    %253 = vmatprep.mubr.bf16.mxu0 0
    %254 = vmatmul.mubr.bf16.gmra.mxu0 %v171
    %v255 = vpop.f32.mrf.mxu0
    %v256 = vadd.f32 0.0, %v255
    %v257 = vpop.f32.mrf.mxu0
    %v258 = vpop.f32.mrf.mxu0
    %v259 = vadd.f32 0.0, %v258
    %v260 = vpop.f32.mrf.mxu0
    %261 = vdwg.mxu0
    %v262 = vld [vmem:[#allocation11] sm:$0xf]
    %v263 = vld [vmem:[#allocation11 + $0x4] sm:$0xf]
    %v264 = vld [vmem:[#allocation11 + $0x8] sm:$0xf]
    %v265 = vld [vmem:[#allocation11 + $0xc] sm:$0xf]
    %v266 = vld [vmem:[#allocation11 + $0x10] sm:$0xf]
    %v267 = vld [vmem:[#allocation11 + $0x14] sm:$0xf]
    %v268 = vld [vmem:[#allocation11 + $0x18] sm:$0xf]
    %v269 = vld [vmem:[#allocation11 + $0x1c] sm:$0xf]
    %v270 = vld [vmem:[#allocation11 + $0x20] sm:$0xf]
    %v271 = vld [vmem:[#allocation11 + $0x24] sm:$0xf]
    %v272 = vld [vmem:[#allocation11 + $0x28] sm:$0xf]
    %v273 = vld [vmem:[#allocation11 + $0x2c] sm:$0xf]
    %v274 = vld [vmem:[#allocation11 + $0x30] sm:$0xf]
    %v275 = vld [vmem:[#allocation11 + $0x34] sm:$0xf]
    %v276 = vld [vmem:[#allocation11 + $0x38] sm:$0xf]
    %v277 = vld [vmem:[#allocation11 + $0x3c] sm:$0xf]
    %v280 = vunpack.c.l.b16 %v142
    %v281 = vunpack.c.l.b16 %v143
    %v282 = vpack.c.b16 %v281, %v280
    %v300 = vunpack.c.l.b16 %v262
    %v301 = vunpack.c.l.b16 %v263
    %v302 = vunpack.c.l.b16 %v264
    %v303 = vunpack.c.l.b16 %v265
    %v304 = vunpack.c.l.b16 %v266
    %v305 = vunpack.c.l.b16 %v267
    %v306 = vunpack.c.l.b16 %v268
    %v307 = vunpack.c.l.b16 %v269
    %v308 = vunpack.c.l.b16 %v270
    %v309 = vunpack.c.l.b16 %v271
    %v310 = vunpack.c.l.b16 %v272
    %v311 = vunpack.c.l.b16 %v273
    %v312 = vunpack.c.l.b16 %v274
    %v313 = vunpack.c.l.b16 %v275
    %v314 = vunpack.c.l.b16 %v276
    %v315 = vunpack.c.l.b16 %v277
    %v316 = vpack.c.b16 %v301, %v300
    %v317 = vpack.c.b16 %v303, %v302
    %v318 = vpack.c.b16 %v305, %v304
    %v319 = vpack.c.b16 %v307, %v306
    %v320 = vpack.c.b16 %v309, %v308
    %v321 = vpack.c.b16 %v311, %v310
    %v322 = vpack.c.b16 %v313, %v312
    %v323 = vpack.c.b16 %v315, %v314
    %332 = vmatprep.subr.bf16.mxu0 0
    %333 = vmatpush1.bf16.msra.mxu0 %v323
    %334 = vmatprep.subr.bf16.mxu0 0
    %335 = vmatpush1.bf16.msra.mxu0 %v322
    %336 = vmatprep.subr.bf16.mxu0 0
    %337 = vmatpush1.bf16.msra.mxu0 %v321
    %338 = vmatprep.subr.bf16.mxu0 0
    %339 = vmatpush1.bf16.msra.mxu0 %v320
    %340 = vmatprep.subr.bf16.mxu0 0
    %341 = vmatpush1.bf16.msra.mxu0 %v319
    %342 = vmatprep.subr.bf16.mxu0 0
    %343 = vmatpush1.bf16.msra.mxu0 %v318
    %344 = vmatprep.subr.bf16.mxu0 0
    %345 = vmatpush1.bf16.msra.mxu0 %v317
    %346 = vmatprep.subr.bf16.mxu0 0
    %347 = vmatpush1.bf16.msra.mxu0 %v316
    %348 = vmatprep.subr.bf16.mxu0 0
    %349 = vmatpush2.bf16.msra.mxu0 0
    %350 = vmatprep.subr.bf16.mxu0 0
    %351 = vmatpush2.bf16.msra.mxu0 0
    %352 = vmatprep.subr.bf16.mxu0 0
    %353 = vmatpush2.bf16.msra.mxu0 0
    %354 = vmatprep.subr.bf16.mxu0 0
    %355 = vmatpush2.bf16.msra.mxu0 0
    %356 = vmatprep.subr.bf16.mxu0 0
    %357 = vmatpush2.bf16.msra.mxu0 0
    %358 = vmatprep.subr.bf16.mxu0 0
    %359 = vmatpush2.bf16.msra.mxu0 0
    %360 = vmatprep.subr.bf16.mxu0 0
    %361 = vmatpush2.bf16.msra.mxu0 0
    %362 = vmatprep.subr.bf16.mxu0 0
    %363 = vmatpush2.bf16.msra.mxu0 0
    %364 = vmatprep.mubr.bf16.mxu0 0
    %365 = vmatmul.mubr.bf16.gmra.mxu0 %v282
    %v366 = vpop.f32.mrf.mxu0
    %v367 = vadd.f32 0.0, %v366
    %v368 = vpop.f32.mrf.mxu0
    %v369 = vpop.f32.mrf.mxu0
    %v370 = vadd.f32 0.0, %v369
    %v371 = vpop.f32.mrf.mxu0
    %372 = vdwg.mxu0
    %v375 = vunpack.c.l.b16 %v144
    %v376 = vunpack.c.l.b16 %v145
    %v377 = vpack.c.b16 %v376, %v375
    %379 = vmatprep.subr.bf16.mxu0 0
    %380 = vmatpush1.bf16.msra.mxu0 %v323
    %381 = vmatprep.subr.bf16.mxu0 0
    %382 = vmatpush1.bf16.msra.mxu0 %v322
    %383 = vmatprep.subr.bf16.mxu0 0
    %384 = vmatpush1.bf16.msra.mxu0 %v321
    %385 = vmatprep.subr.bf16.mxu0 0
    %386 = vmatpush1.bf16.msra.mxu0 %v320
    %387 = vmatprep.subr.bf16.mxu0 0
    %388 = vmatpush1.bf16.msra.mxu0 %v319
    %389 = vmatprep.subr.bf16.mxu0 0
    %390 = vmatpush1.bf16.msra.mxu0 %v318
    %391 = vmatprep.subr.bf16.mxu0 0
    %392 = vmatpush1.bf16.msra.mxu0 %v317
    %393 = vmatprep.subr.bf16.mxu0 0
    %394 = vmatpush1.bf16.msra.mxu0 %v316
    %395 = vmatprep.subr.bf16.mxu0 0
    %396 = vmatpush2.bf16.msra.mxu0 0
    %397 = vmatprep.subr.bf16.mxu0 0
    %398 = vmatpush2.bf16.msra.mxu0 0
    %399 = vmatprep.subr.bf16.mxu0 0
    %400 = vmatpush2.bf16.msra.mxu0 0
    %401 = vmatprep.subr.bf16.mxu0 0
    %402 = vmatpush2.bf16.msra.mxu0 0
    %403 = vmatprep.subr.bf16.mxu0 0
    %404 = vmatpush2.bf16.msra.mxu0 0
    %405 = vmatprep.subr.bf16.mxu0 0
    %406 = vmatpush2.bf16.msra.mxu0 0
    %407 = vmatprep.subr.bf16.mxu0 0
    %408 = vmatpush2.bf16.msra.mxu0 0
    %409 = vmatprep.subr.bf16.mxu0 0
    %410 = vmatpush2.bf16.msra.mxu0 0
    %411 = vmatprep.mubr.bf16.mxu0 0
    %412 = vmatmul.mubr.bf16.gmra.mxu0 %v377
    %v413 = vpop.f32.mrf.mxu0
    %v414 = vadd.f32 0.0, %v413
    %v415 = vpop.f32.mrf.mxu0
    %v416 = vpop.f32.mrf.mxu0
    %v417 = vadd.f32 0.0, %v416
    %v418 = vpop.f32.mrf.mxu0
    %419 = vdwg.mxu0
    %v420 = vadd.f32 %v256, %v367
    %v421 = vadd.f32 %v259, %v370
    %v423 = vlaneseq
    %v424 = vshrl.u32 %v423, 7
    %v425 = vsub.s32 0, %v424
    %v426 = vrot.slane %v148, %v425
    %v428 = vadd.f32 %v420, %v426
    %v429 = vadd.f32 %v421, %v426
    %v430 = vmax.f32 %v428, 0.0
    %v431 = vmax.f32 %v429, 0.0
    %v432 = vadd.f32 %v256, %v414
    %v433 = vadd.f32 %v259, %v417
    %v434 = vadd.f32 %v432, %v426
    %v435 = vadd.f32 %v433, %v426
    %v436 = vmax.f32 %v434, 0.0
    %v437 = vmax.f32 %v435, 0.0
    %v439 = vlaneseq
    %v440 = vshrl.u32 %v439, 7
    %v441 = vsub.s32 0, %v440
    %v442 = vrot.slane %v149, %v441
    %v444 = vmul.f32 %v430, %v442
    %v445 = vmul.f32 %v431, %v442
    %446 = vadd.xlane.f32.xlu0 %v444
    %v447 = vpop.xlane.xlu0 %446
    %448 = vadd.xlane.f32.xlu0 %v445
    %v449 = vpop.xlane.xlu0 %448
    %v450 = vstv %s150
    %v451 = vadd.f32 %v447, %v450
    %v452 = vadd.f32 %v449, %v450
    %v453 = vmul.f32 %v436, %v442
    %v454 = vmul.f32 %v437, %v442
    %455 = vadd.xlane.f32.xlu0 %v453
    %v456 = vpop.xlane.xlu0 %455
    %457 = vadd.xlane.f32.xlu0 %v454
    %v458 = vpop.xlane.xlu0 %457
    %v459 = vadd.f32 %v456, %v450
    %v460 = vadd.f32 %v458, %v450
    %v461 = vsub.f32 0.0, %v451
    %v462 = vsub.f32 0.0, %v452
    %v463 = vmax.f32 %v461, 0.0
    %v464 = vmax.f32 %v462, 0.0
    %v465 = vand.u32 2147483647, %v461
    %v466 = vand.u32 2147483647, %v462
    %v467 = vsub.f32 0.0, %v465
    %v468 = vsub.f32 0.0, %v466
    %v469 = vmul.f32 %v467, 1.442695
    %v470 = vpow.pop %v469
    %v471 = vmul.f32 %v468, 1.442695
    %v472 = vpow.pop %v471
    %v473 = vadd.f32 %v470, 1.0
    %v474 = vlog2.pop %v473
    %v475 = vmul.f32 %v474, 0.6931472
    %v476 = vmul.f32 -0.5, %v470
    %v477 = vadd.f32 %v476, 1.0
    %v478 = vmul.f32 %v477, %v470
    %v479 = vand.u32 2147483647, %v470
    %vm480 = vcmp.lt.f32.partialorder %v479, 0.0004427343
    %v481 = vsel %vm480, %v478, %v475
    %v482 = vadd.f32 %v472, 1.0
    %v483 = vlog2.pop %v482
    %v484 = vmul.f32 %v483, 0.6931472
    %v485 = vmul.f32 -0.5, %v472
    %v486 = vadd.f32 %v485, 1.0
    %v487 = vmul.f32 %v486, %v472
    %v488 = vand.u32 2147483647, %v472
    %vm489 = vcmp.lt.f32.partialorder %v488, 0.0004427343
    %v490 = vsel %vm489, %v487, %v484
    %v491 = vadd.f32 %v463, %v481
    %v492 = vadd.f32 %v464, %v490
    %v493 = vsub.f32 0.6931472, %v491
    %v494 = vsub.f32 0.6931472, %v492
    %v495 = vsub.f32 0.0, %v459
    %v496 = vsub.f32 0.0, %v460
    %v497 = vmax.f32 %v495, 0.0
    %v498 = vmax.f32 %v496, 0.0
    %v499 = vand.u32 2147483647, %v495
    %v500 = vand.u32 2147483647, %v496
    %v501 = vsub.f32 0.0, %v499
    %v502 = vsub.f32 0.0, %v500
    %v503 = vmul.f32 %v501, 1.442695
    %v504 = vpow.pop %v503
    %v505 = vmul.f32 %v502, 1.442695
    %v506 = vpow.pop %v505
    %v507 = vadd.f32 %v504, 1.0
    %v508 = vlog2.pop %v507
    %v509 = vmul.f32 %v508, 0.6931472
    %v510 = vmul.f32 -0.5, %v504
    %v511 = vadd.f32 %v510, 1.0
    %v512 = vmul.f32 %v511, %v504
    %v513 = vand.u32 2147483647, %v504
    %vm514 = vcmp.lt.f32.partialorder %v513, 0.0004427343
    %v515 = vsel %vm514, %v512, %v509
    %v516 = vadd.f32 %v506, 1.0
    %v517 = vlog2.pop %v516
    %v518 = vmul.f32 %v517, 0.6931472
    %v519 = vmul.f32 -0.5, %v506
    %v520 = vadd.f32 %v519, 1.0
    %v521 = vmul.f32 %v520, %v506
    %v522 = vand.u32 2147483647, %v506
    %vm523 = vcmp.lt.f32.partialorder %v522, 0.0004427343
    %v524 = vsel %vm523, %v521, %v518
    %v525 = vadd.f32 %v497, %v515
    %v526 = vadd.f32 %v498, %v524
    %v527 = vadd.f32 %v525, %v459
    %v528 = vadd.f32 %v526, %v460
    %v529 = vsub.f32 %v527, 0.6931472
    %v530 = vsub.f32 %v528, 0.6931472
    %v531 = vsub.f32 %v493, %v529
    %v532 = vsub.f32 %v494, %v530
    %s533 = sadd.s32 0, 0
    %s534 = smul.u32 %s533, 16
    %v535 = vlaneseq
    %v536 = vshrl.u32 %v535, 7
    %v537 = vadd.s32 %v536, 8
    %v538 = vstv %s534
    %v539 = vadd.s32 %v538, %v536
    %v540 = vadd.s32 %v538, %v537
    %vm541 = vcmp.lt.s32.totalorder %v539, 8
    %vm542 = vcmp.lt.s32.totalorder %v540, 8
    %v543 = vsel %vm541, %v531, 0.0
    %v544 = vsel %vm542, %v532, 0.0
    %vm545 = vcmask 7168
    %v546 = vsel %vm545, %v543, 0.0
    %v547 = vsel %vm545, %v544, 0.0
    %v548 = vadd.f32 %v546, %v547
    %549 = vadd.xlane.f32.xlu0 %v548
    %v550 = vpop.xlane.xlu0 %549
    %v551 = vrot.slane %v550, 4
    %v552 = vadd.f32 %v550, %v551
    %v553 = vrot.slane %v552, 2
    %v554 = vadd.f32 %v552, %v553
    %v555 = vrot.slane %v554, 1
    %v556 = vadd.f32 %v554, %v555
    %s557 = vtos %v556
    %v558 = vlaneseq
    %v559 = vand.u32 %v558, 127
    %v560 = vld [vmem:[#allocation12] sm:$0x1]
    %vm561 = vcmp.eq.s32.totalorder %v559, 0
    %v562 = vstv %s557
    %v563 = vsel %vm561, %v562, 0.0
    %v564 = vadd.f32 %v560, %v563
    %565 = vst [vmem:[#allocation12] sm:$0x1] %v564
    %v566 = vld [vmem:[#allocation13] sm:$0xff]
    %v567 = vld [vmem:[#allocation13 + $0x8] sm:$0xff]
    %v568 = vld [vmem:[#allocation13 + $0x10] sm:$0xff]
    %v569 = vld [vmem:[#allocation13 + $0x18] sm:$0xff]
    %v570 = vld [vmem:[#allocation13 + $0x20] sm:$0xff]
    %v571 = vld [vmem:[#allocation13 + $0x28] sm:$0xff]
    %v572 = vld [vmem:[#allocation13 + $0x30] sm:$0xff]
    %v573 = vld [vmem:[#allocation13 + $0x38] sm:$0xff]
    %v574 = vld [vmem:[#allocation13 + $0x40] sm:$0xff]
    %v575 = vld [vmem:[#allocation13 + $0x48] sm:$0xff]
    %v576 = vld [vmem:[#allocation13 + $0x50] sm:$0xff]
    %v577 = vld [vmem:[#allocation13 + $0x58] sm:$0xff]
    %v578 = vld [vmem:[#allocation13 + $0x60] sm:$0xff]
    %v579 = vld [vmem:[#allocation13 + $0x68] sm:$0xff]
    %v580 = vld [vmem:[#allocation13 + $0x70] sm:$0xff]
    %v581 = vld [vmem:[#allocation13 + $0x78] sm:$0xff]
    %582 = vxpose.xlu0.c.b16.start [1/8] %v282, 128
    %583 = vxpose.xlu0.c.b16.cont [2/8] 0, 128
    %584 = vxpose.xlu0.c.b16.cont [3/8] 0, 128
    %585 = vxpose.xlu0.c.b16.cont [4/8] 0, 128
    %586 = vxpose.xlu0.c.b16.cont [5/8] 0, 128
    %587 = vxpose.xlu0.c.b16.cont [6/8] 0, 128
    %588 = vxpose.xlu0.c.b16.cont [7/8] 0, 128
    %589 = vxpose.xlu0.c.b16.end [8/8] 0, 128
    %v590 = vpop.trf.xlu0
    %v591 = vpop.trf.xlu0
    %v592 = vpop.trf.xlu0
    %v593 = vpop.trf.xlu0
    %v594 = vpop.trf.xlu0
    %v595 = vpop.trf.xlu0
    %v596 = vpop.trf.xlu0
    %v597 = vpop.trf.xlu0
    %vm598 = vcmask 130048
    %v600 = vsel %vm598, %v590, 0
    %v603 = vsel %vm598, %v591, 0
    %v606 = vsel %vm598, %v592, 0
    %v609 = vsel %vm598, %v593, 0
    %v612 = vsel %vm598, %v594, 0
    %v615 = vsel %vm598, %v595, 0
    %v618 = vsel %vm598, %v596, 0
    %v621 = vsel %vm598, %v597, 0
    %623 = vmatprep.subr.bf16.mxu0 0
    %624 = vmatpush1.bf16.msra.mxu0 0
    %625 = vmatprep.subr.bf16.mxu0 0
    %626 = vmatpush1.bf16.msra.mxu0 0
    %627 = vmatprep.subr.bf16.mxu0 0
    %628 = vmatpush1.bf16.msra.mxu0 0
    %629 = vmatprep.subr.bf16.mxu0 0
    %630 = vmatpush1.bf16.msra.mxu0 0
    %631 = vmatprep.subr.bf16.mxu0 0
    %632 = vmatpush1.bf16.msra.mxu0 0
    %633 = vmatprep.subr.bf16.mxu0 0
    %634 = vmatpush1.bf16.msra.mxu0 0
    %635 = vmatprep.subr.bf16.mxu0 0
    %636 = vmatpush1.bf16.msra.mxu0 0
    %637 = vmatprep.subr.bf16.mxu0 0
    %638 = vmatpush1.bf16.msra.mxu0 %v171
    %639 = vmatprep.subr.bf16.mxu0 0
    %640 = vmatpush2.bf16.msra.mxu0 0
    %641 = vmatprep.subr.bf16.mxu0 0
    %642 = vmatpush2.bf16.msra.mxu0 0
    %643 = vmatprep.subr.bf16.mxu0 0
    %644 = vmatpush2.bf16.msra.mxu0 0
    %645 = vmatprep.subr.bf16.mxu0 0
    %646 = vmatpush2.bf16.msra.mxu0 0
    %647 = vmatprep.subr.bf16.mxu0 0
    %648 = vmatpush2.bf16.msra.mxu0 0
    %649 = vmatprep.subr.bf16.mxu0 0
    %650 = vmatpush2.bf16.msra.mxu0 0
    %651 = vmatprep.subr.bf16.mxu0 0
    %652 = vmatpush2.bf16.msra.mxu0 0
    %653 = vmatprep.subr.bf16.mxu0 0
    %654 = vmatpush2.bf16.msra.mxu0 0
    %655 = vmatprep.mubr.bf16.mxu0 0
    %656 = vmatmul.mubr.bf16.gmra.mxu0 %v600
    %v657 = vpop.f32.mrf.mxu0
    %v658 = vadd.f32 0.0, %v657
    %v659 = vpop.f32.mrf.mxu0
    %v660 = vpop.f32.mrf.mxu0
    %v661 = vadd.f32 0.0, %v660
    %v662 = vpop.f32.mrf.mxu0
    %663 = vmatprep.mubr.bf16.mxu0 0
    %664 = vmatmul.mubr.bf16.gmra.mxu0 %v603
    %v665 = vpop.f32.mrf.mxu0
    %v666 = vadd.f32 0.0, %v665
    %v667 = vpop.f32.mrf.mxu0
    %v668 = vpop.f32.mrf.mxu0
    %v669 = vadd.f32 0.0, %v668
    %v670 = vpop.f32.mrf.mxu0
    %671 = vmatprep.mubr.bf16.mxu0 0
    %672 = vmatmul.mubr.bf16.gmra.mxu0 %v606
    %v673 = vpop.f32.mrf.mxu0
    %v674 = vadd.f32 0.0, %v673
    %v675 = vpop.f32.mrf.mxu0
    %v676 = vpop.f32.mrf.mxu0
    %v677 = vadd.f32 0.0, %v676
    %v678 = vpop.f32.mrf.mxu0
    %679 = vmatprep.mubr.bf16.mxu0 0
    %680 = vmatmul.mubr.bf16.gmra.mxu0 %v609
    %v681 = vpop.f32.mrf.mxu0
    %v682 = vadd.f32 0.0, %v681
    %v683 = vpop.f32.mrf.mxu0
    %v684 = vpop.f32.mrf.mxu0
    %v685 = vadd.f32 0.0, %v684
    %v686 = vpop.f32.mrf.mxu0
    %687 = vmatprep.mubr.bf16.mxu0 0
    %688 = vmatmul.mubr.bf16.gmra.mxu0 %v612
    %v689 = vpop.f32.mrf.mxu0
    %v690 = vadd.f32 0.0, %v689
    %v691 = vpop.f32.mrf.mxu0
    %v692 = vpop.f32.mrf.mxu0
    %v693 = vadd.f32 0.0, %v692
    %v694 = vpop.f32.mrf.mxu0
    %695 = vmatprep.mubr.bf16.mxu0 0
    %696 = vmatmul.mubr.bf16.gmra.mxu0 %v615
    %v697 = vpop.f32.mrf.mxu0
    %v698 = vadd.f32 0.0, %v697
    %v699 = vpop.f32.mrf.mxu0
    %v700 = vpop.f32.mrf.mxu0
    %v701 = vadd.f32 0.0, %v700
    %v702 = vpop.f32.mrf.mxu0
    %703 = vmatprep.mubr.bf16.mxu0 0
    %704 = vmatmul.mubr.bf16.gmra.mxu0 %v618
    %v705 = vpop.f32.mrf.mxu0
    %v706 = vadd.f32 0.0, %v705
    %v707 = vpop.f32.mrf.mxu0
    %v708 = vpop.f32.mrf.mxu0
    %v709 = vadd.f32 0.0, %v708
    %v710 = vpop.f32.mrf.mxu0
    %711 = vmatprep.mubr.bf16.mxu0 0
    %712 = vmatmul.mubr.bf16.gmra.mxu0 %v621
    %v713 = vpop.f32.mrf.mxu0
    %v714 = vadd.f32 0.0, %v713
    %v715 = vpop.f32.mrf.mxu0
    %v716 = vpop.f32.mrf.mxu0
    %v717 = vadd.f32 0.0, %v716
    %v718 = vpop.f32.mrf.mxu0
    %719 = vdwg.mxu0
    %v720 = vadd.f32 %v566, %v658
    %v721 = vadd.f32 %v567, %v661
    %v722 = vadd.f32 %v568, %v666
    %v723 = vadd.f32 %v569, %v669
    %v724 = vadd.f32 %v570, %v674
    %v725 = vadd.f32 %v571, %v677
    %v726 = vadd.f32 %v572, %v682
    %v727 = vadd.f32 %v573, %v685
    %v728 = vadd.f32 %v574, %v690
    %v729 = vadd.f32 %v575, %v693
    %v730 = vadd.f32 %v576, %v698
    %v731 = vadd.f32 %v577, %v701
    %v732 = vadd.f32 %v578, %v706
    %v733 = vadd.f32 %v579, %v709
    %v734 = vadd.f32 %v580, %v714
    %v735 = vadd.f32 %v581, %v717
    %736 = vst [vmem:[#allocation13] sm:$0xff] %v720
    %737 = vst [vmem:[#allocation13 + $0x8] sm:$0xff] %v721
    %738 = vst [vmem:[#allocation13 + $0x10] sm:$0xff] %v722
    %739 = vst [vmem:[#allocation13 + $0x18] sm:$0xff] %v723
    %740 = vst [vmem:[#allocation13 + $0x20] sm:$0xff] %v724
    %741 = vst [vmem:[#allocation13 + $0x28] sm:$0xff] %v725
    %742 = vst [vmem:[#allocation13 + $0x30] sm:$0xff] %v726
    %743 = vst [vmem:[#allocation13 + $0x38] sm:$0xff] %v727
    %744 = vst [vmem:[#allocation13 + $0x40] sm:$0xff] %v728
    %745 = vst [vmem:[#allocation13 + $0x48] sm:$0xff] %v729
    %746 = vst [vmem:[#allocation13 + $0x50] sm:$0xff] %v730
    %747 = vst [vmem:[#allocation13 + $0x58] sm:$0xff] %v731
    %748 = vst [vmem:[#allocation13 + $0x60] sm:$0xff] %v732
    %749 = vst [vmem:[#allocation13 + $0x68] sm:$0xff] %v733
    %750 = vst [vmem:[#allocation13 + $0x70] sm:$0xff] %v734
    %751 = vst [vmem:[#allocation13 + $0x78] sm:$0xff] %v735
    // Predicated region
    $region58: #{tpu_custom_call.1} parent=1 // pred_check
      _
    $region59: #{tpu_custom_call.1} parent=1 // pred_check_branch
      %753 = sbr.rel (0) target = $region61
    $region60: #{tpu_custom_call.1} parent=1 // pred_region
      %s755 = ssub.s32 16, 16
      %756 = vsyncadd [#allocation5], %s755
      %s758 = sshll.u32 [#allocation12], 4
      %s759 = int_to_ptr.vmem [resolvable:$true] %s758
      %761 = dma.vmem_to_hbm [thread:$0]  %s759, 16, %s8, [#allocation5]
    $region61: #{tpu_custom_call.1} parent=1 // pred_fallthru
      _
    // Predicated region
    $region62: #{tpu_custom_call.1} parent=1 // pred_check
      _
    $region63: #{tpu_custom_call.1} parent=1 // pred_check_branch
      %763 = sbr.rel (0) target = $region65
    $region64: #{tpu_custom_call.1} parent=1 // pred_region
      %s765 = ssub.s32 2048, 2048
      %766 = vsyncadd [#allocation14], %s765
      %s767 = sshll.u32 [#allocation13], 4
      %s768 = int_to_ptr.vmem [resolvable:$true] %s767
      %773 = dma.vmem_to_hbm [thread:$0]  %s768, 2048, %s9, [#allocation14], 128, 128, 8
    $region65: #{tpu_custom_call.1} parent=1 // pred_fallthru
      _
    // Predicated region
    $region66: #{tpu_custom_call.1} parent=1 // pred_check
      _
    $region67: #{tpu_custom_call.1} parent=1 // pred_check_branch
      %775 = sbr.rel (0) target = $region69
    $region68: #{tpu_custom_call.1} parent=1 // pred_region
      %776 = dma.done [#allocation5], 16
    $region69: #{tpu_custom_call.1} parent=1 // pred_fallthru
      _
    // Predicated region
    $region70: #{tpu_custom_call.1} parent=1 // pred_check
      _
    $region71: #{tpu_custom_call.1} parent=1 // pred_check_branch
      %778 = sbr.rel (0) target = $region73
    $region72: #{tpu_custom_call.1} parent=1 // pred_region
      %779 = dma.done [#allocation14], 2048
    $region73: #{tpu_custom_call.1} parent=1 // pred_fallthru
      _
    %780 = vsyncpa [#allocation4], 1
    %781 = vsyncpa [#allocation7], 1
    %782 = vsyncpa [#allocation10], 1
    %783 = vsyncpa [#allocation5], 1
    %784 = vsyncpa [#allocation14], 1

</llo_original>
